<compile_context>
chip_gen: v5e
topology: v5e:2x2
jax: 0.10.0
libtpu: 0.0.40
codegen_flags: <defaults>
</compile_context>

<pallas_src>
import jax
import jax.numpy as jnp
from jax import lax
from jax.experimental import pallas as pl
from jax.experimental.pallas import tpu as pltpu


def _round_up(x, m):
    return ((x + m - 1) // m) * m


def discriminator_kernel(
    x_ref,      # (bt, n_z)   bf16
    w1_ref,     # (n_z, Hp)   bf16
    w2_ref,     # (Hp, Hp)    bf16
    w3_ref,     # (Hp, Hp)    bf16
    w4_ref,     # (Hp, Hp)    bf16
    w5_ref,     # (1, Hp)     bf16  (row form of the (H, 1) weight)
    bias_ref,   # (4, Hp)     f32   (rows = b1..b4)
    b5_ref,     # (1,)        f32   scalar in SMEM
    o_ref,      # (1, bt)     f32   lane-dense output row
):
    cdt = w1_ref.dtype           # matmul / activation dtype (bf16)
    b = bias_ref[...]            # (4, Hp) f32

    def layer(h, w_ref, row):
        # bf16 MXU matmul, f32 accumulate; fused bias + ReLU in f32,
        # then a single cast back to bf16 for the next layer.
        acc = jnp.dot(h, w_ref[...], preferred_element_type=jnp.float32)
        return jnp.maximum(acc + b[row:row + 1, :], 0.0).astype(cdt)

    h = layer(x_ref[...], w1_ref, 0)
    h = layer(h, w2_ref, 1)
    h = layer(h, w3_ref, 2)
    h = layer(h, w4_ref, 3)

    # Final Linear(Hp, 1): contract Hp of the (1, Hp) bf16 weight row against
    # Hp of the bf16 activations -> lane-dense (1, bt) result (no masked
    # last-dim-1 stores, no in-kernel transpose).
    s = lax.dot_general(
        w5_ref[...], h,
        dimension_numbers=(((1,), (1,)), ((), ())),
        preferred_element_type=jnp.float32,
    )                                           # (1, bt) f32
    o_ref[...] = jnp.tanh(s + b5_ref[0]).astype(o_ref.dtype)


def discriminator_forward(x, params, *, batch_tile=None,
                          matmul_dtype=jnp.bfloat16):
    """x: (B, n_z) float32. params: w1..w5 as (in, out), b1..b5 as (1, out)."""
    B, n_z = x.shape
    H = params["w1"].shape[1]

    # --- generation-aware VMEM budget & default batch tile -------------------
    try:
        vmem_capacity = int(pltpu.get_tpu_info().vmem_capacity_bytes)
    except Exception:
        vmem_capacity = 64 << 20            # conservative fallback (v7x per-TC)
    vmem_cap = int(vmem_capacity * 0.78)    # leave headroom for Mosaic scratch

    if batch_tile is None:
        # 128 MiB parts (v5e/v6e) take a bigger tile; v7x (64 MiB/TC) keeps 256.
        batch_tile = 512 if vmem_capacity >= (96 << 20) else 256

    # --- batch tiling ---------------------------------------------------------
    if B <= 128:
        bt = max(8, _round_up(B, 8))                  # single grid step
        b_pad = bt
    else:
        # Guarantee >= 2 grid steps so the "parallel" axis shards across both
        # v7x TensorCores; blocks %128 for lane-dense (1, bt) output stores.
        bt = min(_round_up(batch_tile, 128), _round_up(pl.cdiv(B, 2), 128))
        b_pad = _round_up(B, bt)
    grid = (b_pad // bt,)

    # --- hidden-dim padding (exact: zero-padded units stay zero) -------------
    hp128 = _round_up(H, 128)
    hp256 = _round_up(H, 256)
    # Prefer full 256-wide MXU tiles (v6e/v7x) when the extra padding is small.
    Hp = hp256 if (hp256 - hp128) * 8 <= hp128 else hp128

    def pad2(a, rows, cols):
        a = jnp.asarray(a, jnp.float32)
        return jnp.pad(a, ((0, rows - a.shape[0]), (0, cols - a.shape[1])))

    # --- operands -------------------------------------------------------------
    x = x.astype(matmul_dtype)                         # bf16 streaming input
    if b_pad != B:
        x = jnp.pad(x, ((0, b_pad - B), (0, 0)))

    w1 = pad2(params["w1"], n_z, Hp).astype(matmul_dtype)
    w2 = pad2(params["w2"], Hp, Hp).astype(matmul_dtype)
    w3 = pad2(params["w3"], Hp, Hp).astype(matmul_dtype)
    w4 = pad2(params["w4"], Hp, Hp).astype(matmul_dtype)
    w5_row = pad2(params["w5"].reshape(1, H), 1, Hp).astype(matmul_dtype)
    bias_pack = jnp.concatenate(
        [pad2(params[k].reshape(1, H), 1, Hp) for k in ("b1", "b2", "b3", "b4")],
        axis=0).astype(jnp.float32)                    # (4, Hp) f32
    b5 = params["b5"].reshape(1).astype(jnp.float32)   # SMEM scalar

    # --- VMEM budget + cost estimate ------------------------------------------
    def nbytes(a):
        return a.size * a.dtype.itemsize

    weight_bytes = sum(nbytes(a) for a in (w1, w2, w3, w4, w5_row, bias_pack))
    # TODO(synk): when weight_bytes approaches ~half of vmem_cap (H ~2k on v7x),
    # add a contraction (K) grid axis over Hp with an f32 VMEM accumulator
    # (init/finalize via pl.when) instead of full HpxHp resident blocks.

    cost = pl.CostEstimate(
        flops=2 * b_pad * (n_z * Hp + 3 * Hp * Hp + Hp),
        transcendentals=b_pad,                         # tanh per output element
        bytes_accessed=weight_bytes + b_pad * n_z * 2 + b_pad * 4 + 4,
    )

    operands = (x, w1, w2, w3, w4, w5_row, bias_pack, b5)

    def build_call(single_buffer_weights):
        def rep(shape):                                # replicated (constant) block
            if single_buffer_weights:
                return pl.BlockSpec(shape, lambda i: (0, 0),
                                    pipeline_mode=pl.Buffered(1))
            return pl.BlockSpec(shape, lambda i: (0, 0))

        in_specs = [
            pl.BlockSpec((bt, n_z), lambda i: (i, 0)),            # x tile (batch)
            rep((n_z, Hp)),                                       # w1
            rep((Hp, Hp)), rep((Hp, Hp)), rep((Hp, Hp)),          # w2..w4
            rep((1, Hp)),                                         # w5 row
            rep((4, Hp)),                                         # packed biases
            pl.BlockSpec(memory_space=pltpu.MemorySpace.SMEM),    # b5 scalar
        ]
        out_spec = pl.BlockSpec((1, bt), lambda i: (0, i))        # lane-dense out

        wmul = 1 if single_buffer_weights else 2
        io_bytes = 2 * (bt * n_z * 2 + bt * 4)          # dbl-buffered x + out row
        act_bytes = 2 * bt * Hp * (4 + 2)               # f32 acc + bf16 act, margin
        vmem_limit = int(min(
            max(wmul * weight_bytes + io_bytes + act_bytes + (4 << 20), 16 << 20),
            vmem_cap))

        return pl.pallas_call(
            discriminator_kernel,
            out_shape=jax.ShapeDtypeStruct((1, b_pad), jnp.float32),
            grid_spec=pltpu.PrefetchScalarGridSpec(
                num_scalar_prefetch=0,
                grid=grid,
                in_specs=in_specs,
                out_specs=out_spec,
            ),
            compiler_params=pltpu.CompilerParams(
                dimension_semantics=("parallel",),      # shards across TCs on v7x
                vmem_limit_bytes=vmem_limit,
            ),
            cost_estimate=cost,
        )

    try:
        out_row = build_call(True)(*operands)
    except Exception:
        # Fallback if this jax build rejects single-buffered constant blocks.
        out_row = build_call(False)(*operands)

    # back to PyTorch layout (B, 1)
    return out_row[0, :B].reshape(B, 1)


def init_params(key, n_z, dim_h):
    """Deterministic synthetic init (shapes match the nn.Linear layers)."""
    H = dim_h * 4
    ks = jax.random.split(key, 10)
    scale = 0.1

    def w(k, shape):
        return (scale * jax.random.normal(k, shape)).astype(jnp.float32)

    return {
        "w1": w(ks[0], (n_z, H)), "b1": w(ks[1], (1, H)),
        "w2": w(ks[2], (H, H)),   "b2": w(ks[3], (1, H)),
        "w3": w(ks[4], (H, H)),   "b3": w(ks[5], (1, H)),
        "w4": w(ks[6], (H, H)),   "b4": w(ks[7], (1, H)),
        "w5": w(ks[8], (H, 1)),   "b5": w(ks[9], (1, 1)),
    }


def reference_forward(x, p):
    """Pure-JAX f32 reference of the same MLP (sanity check)."""
    h = jnp.maximum(x @ p["w1"] + p["b1"], 0.0)
    h = jnp.maximum(h @ p["w2"] + p["b2"], 0.0)
    h = jnp.maximum(h @ p["w3"] + p["b3"], 0.0)
    h = jnp.maximum(h @ p["w4"] + p["b4"], 0.0)
    return jnp.tanh(h @ p["w5"] + p["b5"])


if __name__ == "__main__":
    key = jax.random.PRNGKey(0)
    k_x, k_p, k_x2 = jax.random.split(key, 3)

    # Small shapes consistent with the module: args.n_z=8, args.dim_h=8 -> hidden=32
    B, n_z, dim_h = 16, 8, 8
    params = init_params(k_p, n_z, dim_h)

    # Single-tile path (B <= 128, one grid step).
    x = jax.random.normal(k_x, (B, n_z), dtype=jnp.float32)
    out = jax.block_until_ready(discriminator_forward(x, params))
    ref = jax.block_until_ready(reference_forward(x, params))
    assert out.shape == (B, 1)
    # bf16 operands / bf16 inter-layer activations with f32 accumulation.
    assert jnp.allclose(out, ref, atol=3e-2), float(jnp.max(jnp.abs(out - ref)))

    # Multi-tile / padded path (grid > 1, 128-aligned lane-dense out blocks).
    B2 = 300
    x2 = jax.random.normal(k_x2, (B2, n_z), dtype=jnp.float32)
    out2 = jax.block_until_ready(
        discriminator_forward(x2, params, batch_tile=128))
    ref2 = jax.block_until_ready(reference_forward(x2, params))
    assert out2.shape == (B2, 1)
    assert jnp.allclose(out2, ref2, atol=3e-2), float(jnp.max(jnp.abs(out2 - ref2)))

    print("KERNEL_OK")
</pallas_src>

<mosaic_0001>
module attributes {stable_mosaic.version = 11 : i64} {
  func.func @discriminator_kernel(%arg0: i32, %arg1: memref<16x8xbf16, #tpu.memory_space<vmem>>, %arg2: memref<8x128xbf16, #tpu.memory_space<vmem>>, %arg3: memref<128x128xbf16, #tpu.memory_space<vmem>>, %arg4: memref<128x128xbf16, #tpu.memory_space<vmem>>, %arg5: memref<128x128xbf16, #tpu.memory_space<vmem>>, %arg6: memref<1x128xbf16, #tpu.memory_space<vmem>>, %arg7: memref<4x128xf32, #tpu.memory_space<vmem>>, %arg8: memref<1xf32, #tpu.memory_space<smem>>, %arg9: memref<1x16xf32, #tpu.memory_space<vmem>>) attributes {dimension_semantics = [#tpu.dimension_semantics<parallel>], iteration_bounds = array<i64: 1>, scalar_prefetch = 0 : i64, scratch_operands = 0 : i64, tpu.core_type = #tpu.core_type<tc>, window_params = [{transform_indices = @transform_0, window_bounds = array<i64: 16, 8>}, {pipeline_mode = #tpu.pipeline_mode<synchronous>, transform_indices = @transform_1, window_bounds = array<i64: 8, 128>}, {pipeline_mode = #tpu.pipeline_mode<synchronous>, transform_indices = @transform_2, window_bounds = array<i64: 128, 128>}, {pipeline_mode = #tpu.pipeline_mode<synchronous>, transform_indices = @transform_3, window_bounds = array<i64: 128, 128>}, {pipeline_mode = #tpu.pipeline_mode<synchronous>, transform_indices = @transform_4, window_bounds = array<i64: 128, 128>}, {pipeline_mode = #tpu.pipeline_mode<synchronous>, transform_indices = @transform_5, window_bounds = array<i64: 1, 128>}, {pipeline_mode = #tpu.pipeline_mode<synchronous>, transform_indices = @transform_6, window_bounds = array<i64: 4, 128>}, {transform_indices = @transform_7, window_bounds = array<i64: 1>}, {transform_indices = @transform_8, window_bounds = array<i64: 1, 16>}]} {
    %c0 = arith.constant 0 : index
    %c0_0 = arith.constant 0 : index
    %0 = vector.load %arg7[%c0, %c0_0] : memref<4x128xf32, #tpu.memory_space<vmem>>, vector<4x128xf32>
    %c0_1 = arith.constant 0 : index
    %c0_2 = arith.constant 0 : index
    %1 = vector.load %arg1[%c0_1, %c0_2] : memref<16x8xbf16, #tpu.memory_space<vmem>>, vector<16x8xbf16>
    %c0_3 = arith.constant 0 : index
    %c0_4 = arith.constant 0 : index
    %2 = vector.load %arg2[%c0_3, %c0_4] : memref<8x128xbf16, #tpu.memory_space<vmem>>, vector<8x128xbf16>
    %cst = arith.constant dense<0.000000e+00> : vector<16x128xf32>
    %3 = tpu.matmul %1, %2, %cst {dimension_numbers = #tpu.dot_dimension_numbers<[1], [0], [0], [1], [0, 0, 1, 1], [], []>} : vector<16x8xbf16>, vector<8x128xbf16>, vector<16x128xf32> -> vector<16x128xf32>
    %4 = vector.extract_strided_slice %0 {offsets = [0, 0], sizes = [1, 128], strides = [1, 1]} : vector<4x128xf32> to vector<1x128xf32>
    %5 = vector.broadcast %4 : vector<1x128xf32> to vector<16x128xf32>
    %6 = arith.addf %3, %5 : vector<16x128xf32>
    %cst_5 = arith.constant 0.000000e+00 : f32
    %7 = vector.broadcast %cst_5 : f32 to vector<16x128xf32>
    %8 = arith.maximumf %6, %7 : vector<16x128xf32>
    %9 = arith.truncf %8 : vector<16x128xf32> to vector<16x128xbf16>
    %c0_6 = arith.constant 0 : index
    %c0_7 = arith.constant 0 : index
    %10 = vector.load %arg3[%c0_6, %c0_7] : memref<128x128xbf16, #tpu.memory_space<vmem>>, vector<128x128xbf16>
    %cst_8 = arith.constant dense<0.000000e+00> : vector<16x128xf32>
    %11 = tpu.matmul %9, %10, %cst_8 {dimension_numbers = #tpu.dot_dimension_numbers<[1], [0], [0], [1], [0, 0, 1, 1], [], []>} : vector<16x128xbf16>, vector<128x128xbf16>, vector<16x128xf32> -> vector<16x128xf32>
    %12 = vector.extract_strided_slice %0 {offsets = [1, 0], sizes = [1, 128], strides = [1, 1]} : vector<4x128xf32> to vector<1x128xf32>
    %13 = vector.broadcast %12 : vector<1x128xf32> to vector<16x128xf32>
    %14 = arith.addf %11, %13 : vector<16x128xf32>
    %cst_9 = arith.constant 0.000000e+00 : f32
    %15 = vector.broadcast %cst_9 : f32 to vector<16x128xf32>
    %16 = arith.maximumf %14, %15 : vector<16x128xf32>
    %17 = arith.truncf %16 : vector<16x128xf32> to vector<16x128xbf16>
    %c0_10 = arith.constant 0 : index
    %c0_11 = arith.constant 0 : index
    %18 = vector.load %arg4[%c0_10, %c0_11] : memref<128x128xbf16, #tpu.memory_space<vmem>>, vector<128x128xbf16>
    %cst_12 = arith.constant dense<0.000000e+00> : vector<16x128xf32>
    %19 = tpu.matmul %17, %18, %cst_12 {dimension_numbers = #tpu.dot_dimension_numbers<[1], [0], [0], [1], [0, 0, 1, 1], [], []>} : vector<16x128xbf16>, vector<128x128xbf16>, vector<16x128xf32> -> vector<16x128xf32>
    %20 = vector.extract_strided_slice %0 {offsets = [2, 0], sizes = [1, 128], strides = [1, 1]} : vector<4x128xf32> to vector<1x128xf32>
    %21 = vector.broadcast %20 : vector<1x128xf32> to vector<16x128xf32>
    %22 = arith.addf %19, %21 : vector<16x128xf32>
    %cst_13 = arith.constant 0.000000e+00 : f32
    %23 = vector.broadcast %cst_13 : f32 to vector<16x128xf32>
    %24 = arith.maximumf %22, %23 : vector<16x128xf32>
    %25 = arith.truncf %24 : vector<16x128xf32> to vector<16x128xbf16>
    %c0_14 = arith.constant 0 : index
    %c0_15 = arith.constant 0 : index
    %26 = vector.load %arg5[%c0_14, %c0_15] : memref<128x128xbf16, #tpu.memory_space<vmem>>, vector<128x128xbf16>
    %cst_16 = arith.constant dense<0.000000e+00> : vector<16x128xf32>
    %27 = tpu.matmul %25, %26, %cst_16 {dimension_numbers = #tpu.dot_dimension_numbers<[1], [0], [0], [1], [0, 0, 1, 1], [], []>} : vector<16x128xbf16>, vector<128x128xbf16>, vector<16x128xf32> -> vector<16x128xf32>
    %28 = vector.extract_strided_slice %0 {offsets = [3, 0], sizes = [1, 128], strides = [1, 1]} : vector<4x128xf32> to vector<1x128xf32>
    %29 = vector.broadcast %28 : vector<1x128xf32> to vector<16x128xf32>
    %30 = arith.addf %27, %29 : vector<16x128xf32>
    %cst_17 = arith.constant 0.000000e+00 : f32
    %31 = vector.broadcast %cst_17 : f32 to vector<16x128xf32>
    %32 = arith.maximumf %30, %31 : vector<16x128xf32>
    %33 = arith.truncf %32 : vector<16x128xf32> to vector<16x128xbf16>
    %c0_18 = arith.constant 0 : index
    %c0_19 = arith.constant 0 : index
    %34 = vector.load %arg6[%c0_18, %c0_19] : memref<1x128xbf16, #tpu.memory_space<vmem>>, vector<1x128xbf16>
    %cst_20 = arith.constant dense<0.000000e+00> : vector<1x16xf32>
    %35 = tpu.matmul %34, %33, %cst_20 {dimension_numbers = #tpu.dot_dimension_numbers<[1], [1], [0], [0], [0, 0, 1, 0], [], []>} : vector<1x128xbf16>, vector<16x128xbf16>, vector<1x16xf32> -> vector<1x16xf32>
    %c0_21 = arith.constant 0 : index
    %36 = memref.load %arg8[%c0_21] : memref<1xf32, #tpu.memory_space<smem>>
    %37 = vector.broadcast %36 : f32 to vector<1x16xf32>
    %38 = arith.addf %35, %37 : vector<1x16xf32>
    %39 = math.tanh %38 : vector<1x16xf32>
    %c0_22 = arith.constant 0 : index
    %c0_23 = arith.constant 0 : index
    %40 = vector.load %arg9[%c0_22, %c0_23] : memref<1x16xf32, #tpu.memory_space<vmem>>, vector<1x16xf32>
    tpu.vector_store %arg9[%c0_22, %c0_23], %39 {strides = array<i32>} : memref<1x16xf32, #tpu.memory_space<vmem>>, vector<1x16xf32>,
    return
  }
  func.func @transform_0(%arg0: i32) -> (i32, i32) {
    %c0_i32 = arith.constant 0 : i32
    %c0_i32_0 = arith.constant 0 : i32
    return %arg0, %c0_i32 : i32, i32
  }
  func.func @transform_1(%arg0: i32) -> (i32, i32) {
    %c0_i32 = arith.constant 0 : i32
    %c0_i32_0 = arith.constant 0 : i32
    %c0_i32_1 = arith.constant 0 : i32
    return %c0_i32, %c0_i32_0 : i32, i32
  }
  func.func @transform_2(%arg0: i32) -> (i32, i32) {
    %c0_i32 = arith.constant 0 : i32
    %c0_i32_0 = arith.constant 0 : i32
    %c0_i32_1 = arith.constant 0 : i32
    return %c0_i32, %c0_i32_0 : i32, i32
  }
  func.func @transform_3(%arg0: i32) -> (i32, i32) {
    %c0_i32 = arith.constant 0 : i32
    %c0_i32_0 = arith.constant 0 : i32
    %c0_i32_1 = arith.constant 0 : i32
    return %c0_i32, %c0_i32_0 : i32, i32
  }
  func.func @transform_4(%arg0: i32) -> (i32, i32) {
    %c0_i32 = arith.constant 0 : i32
    %c0_i32_0 = arith.constant 0 : i32
    %c0_i32_1 = arith.constant 0 : i32
    return %c0_i32, %c0_i32_0 : i32, i32
  }
  func.func @transform_5(%arg0: i32) -> (i32, i32) {
    %c0_i32 = arith.constant 0 : i32
    %c0_i32_0 = arith.constant 0 : i32
    %c0_i32_1 = arith.constant 0 : i32
    return %c0_i32, %c0_i32_0 : i32, i32
  }
  func.func @transform_6(%arg0: i32) -> (i32, i32) {
    %c0_i32 = arith.constant 0 : i32
    %c0_i32_0 = arith.constant 0 : i32
    %c0_i32_1 = arith.constant 0 : i32
    return %c0_i32, %c0_i32_0 : i32, i32
  }
  func.func @transform_7(%arg0: i32) -> i32 {
    %c0_i32 = arith.constant 0 : i32
    %c0_i32_0 = arith.constant 0 : i32
    return %c0_i32 : i32
  }
  func.func @transform_8(%arg0: i32) -> (i32, i32) {
    %c0_i32 = arith.constant 0 : i32
    %c0_i32_0 = arith.constant 0 : i32
    return %c0_i32, %arg0 : i32, i32
  }
}

module attributes {stable_mosaic.version = 11 : i64} {
  func.func @discriminator_kernel(%arg0: i32, %arg1: memref<16x8xbf16, #tpu.memory_space<vmem>>, %arg2: memref<8x128xbf16, #tpu.memory_space<vmem>>, %arg3: memref<128x128xbf16, #tpu.memory_space<vmem>>, %arg4: memref<128x128xbf16, #tpu.memory_space<vmem>>, %arg5: memref<128x128xbf16, #tpu.memory_space<vmem>>, %arg6: memref<1x128xbf16, #tpu.memory_space<vmem>>, %arg7: memref<4x128xf32, #tpu.memory_space<vmem>>, %arg8: memref<1xf32, #tpu.memory_space<smem>>, %arg9: memref<1x16xf32, #tpu.memory_space<vmem>>) attributes {dimension_semantics = [#tpu.dimension_semantics<parallel>], iteration_bounds = array<i64: 1>, scalar_prefetch = 0 : i64, scratch_operands = 0 : i64, tpu.core_type = #tpu.core_type<tc>, window_params = [{transform_indices = @transform_0, window_bounds = array<i64: 16, 8>}, {pipeline_mode = #tpu.pipeline_mode<synchronous>, transform_indices = @transform_1, window_bounds = array<i64: 8, 128>}, {pipeline_mode = #tpu.pipeline_mode<synchronous>, transform_indices = @transform_2, window_bounds = array<i64: 128, 128>}, {pipeline_mode = #tpu.pipeline_mode<synchronous>, transform_indices = @transform_3, window_bounds = array<i64: 128, 128>}, {pipeline_mode = #tpu.pipeline_mode<synchronous>, transform_indices = @transform_4, window_bounds = array<i64: 128, 128>}, {pipeline_mode = #tpu.pipeline_mode<synchronous>, transform_indices = @transform_5, window_bounds = array<i64: 1, 128>}, {pipeline_mode = #tpu.pipeline_mode<synchronous>, transform_indices = @transform_6, window_bounds = array<i64: 4, 128>}, {transform_indices = @transform_7, window_bounds = array<i64: 1>}, {transform_indices = @transform_8, window_bounds = array<i64: 1, 16>}]} {
    %c0 = arith.constant 0 : index
    %c0_0 = arith.constant 0 : index
    %0 = vector.load %arg7[%c0, %c0_0] : memref<4x128xf32, #tpu.memory_space<vmem>>, vector<4x128xf32>
    %c0_1 = arith.constant 0 : index
    %c0_2 = arith.constant 0 : index
    %1 = vector.load %arg1[%c0_1, %c0_2] : memref<16x8xbf16, #tpu.memory_space<vmem>>, vector<16x8xbf16>
    %c0_3 = arith.constant 0 : index
    %c0_4 = arith.constant 0 : index
    %2 = vector.load %arg2[%c0_3, %c0_4] : memref<8x128xbf16, #tpu.memory_space<vmem>>, vector<8x128xbf16>
    %cst = arith.constant dense<0.000000e+00> : vector<16x128xf32>
    %3 = tpu.matmul %1, %2, %cst {dimension_numbers = #tpu.dot_dimension_numbers<[1], [0], [0], [1], [0, 0, 1, 1], [], []>} : vector<16x8xbf16>, vector<8x128xbf16>, vector<16x128xf32> -> vector<16x128xf32>
    %4 = vector.extract_strided_slice %0 {offsets = [0, 0], sizes = [1, 128], strides = [1, 1]} : vector<4x128xf32> to vector<1x128xf32>
    %5 = vector.broadcast %4 : vector<1x128xf32> to vector<16x128xf32>
    %6 = arith.addf %3, %5 : vector<16x128xf32>
    %cst_5 = arith.constant 0.000000e+00 : f32
    %7 = vector.broadcast %cst_5 : f32 to vector<16x128xf32>
    %8 = arith.maximumf %6, %7 : vector<16x128xf32>
    %9 = arith.truncf %8 : vector<16x128xf32> to vector<16x128xbf16>
    %c0_6 = arith.constant 0 : index
    %c0_7 = arith.constant 0 : index
    %10 = vector.load %arg3[%c0_6, %c0_7] : memref<128x128xbf16, #tpu.memory_space<vmem>>, vector<128x128xbf16>
    %cst_8 = arith.constant dense<0.000000e+00> : vector<16x128xf32>
    %11 = tpu.matmul %9, %10, %cst_8 {dimension_numbers = #tpu.dot_dimension_numbers<[1], [0], [0], [1], [0, 0, 1, 1], [], []>} : vector<16x128xbf16>, vector<128x128xbf16>, vector<16x128xf32> -> vector<16x128xf32>
    %12 = vector.extract_strided_slice %0 {offsets = [1, 0], sizes = [1, 128], strides = [1, 1]} : vector<4x128xf32> to vector<1x128xf32>
    %13 = vector.broadcast %12 : vector<1x128xf32> to vector<16x128xf32>
    %14 = arith.addf %11, %13 : vector<16x128xf32>
    %cst_9 = arith.constant 0.000000e+00 : f32
    %15 = vector.broadcast %cst_9 : f32 to vector<16x128xf32>
    %16 = arith.maximumf %14, %15 : vector<16x128xf32>
    %17 = arith.truncf %16 : vector<16x128xf32> to vector<16x128xbf16>
    %c0_10 = arith.constant 0 : index
    %c0_11 = arith.constant 0 : index
    %18 = vector.load %arg4[%c0_10, %c0_11] : memref<128x128xbf16, #tpu.memory_space<vmem>>, vector<128x128xbf16>
    %cst_12 = arith.constant dense<0.000000e+00> : vector<16x128xf32>
    %19 = tpu.matmul %17, %18, %cst_12 {dimension_numbers = #tpu.dot_dimension_numbers<[1], [0], [0], [1], [0, 0, 1, 1], [], []>} : vector<16x128xbf16>, vector<128x128xbf16>, vector<16x128xf32> -> vector<16x128xf32>
    %20 = vector.extract_strided_slice %0 {offsets = [2, 0], sizes = [1, 128], strides = [1, 1]} : vector<4x128xf32> to vector<1x128xf32>
    %21 = vector.broadcast %20 : vector<1x128xf32> to vector<16x128xf32>
    %22 = arith.addf %19, %21 : vector<16x128xf32>
    %cst_13 = arith.constant 0.000000e+00 : f32
    %23 = vector.broadcast %cst_13 : f32 to vector<16x128xf32>
    %24 = arith.maximumf %22, %23 : vector<16x128xf32>
    %25 = arith.truncf %24 : vector<16x128xf32> to vector<16x128xbf16>
    %c0_14 = arith.constant 0 : index
    %c0_15 = arith.constant 0 : index
    %26 = vector.load %arg5[%c0_14, %c0_15] : memref<128x128xbf16, #tpu.memory_space<vmem>>, vector<128x128xbf16>
    %cst_16 = arith.constant dense<0.000000e+00> : vector<16x128xf32>
    %27 = tpu.matmul %25, %26, %cst_16 {dimension_numbers = #tpu.dot_dimension_numbers<[1], [0], [0], [1], [0, 0, 1, 1], [], []>} : vector<16x128xbf16>, vector<128x128xbf16>, vector<16x128xf32> -> vector<16x128xf32>
    %28 = vector.extract_strided_slice %0 {offsets = [3, 0], sizes = [1, 128], strides = [1, 1]} : vector<4x128xf32> to vector<1x128xf32>
    %29 = vector.broadcast %28 : vector<1x128xf32> to vector<16x128xf32>
    %30 = arith.addf %27, %29 : vector<16x128xf32>
    %cst_17 = arith.constant 0.000000e+00 : f32
    %31 = vector.broadcast %cst_17 : f32 to vector<16x128xf32>
    %32 = arith.maximumf %30, %31 : vector<16x128xf32>
    %33 = arith.truncf %32 : vector<16x128xf32> to vector<16x128xbf16>
    %c0_18 = arith.constant 0 : index
    %c0_19 = arith.constant 0 : index
    %34 = vector.load %arg6[%c0_18, %c0_19] : memref<1x128xbf16, #tpu.memory_space<vmem>>, vector<1x128xbf16>
    %cst_20 = arith.constant dense<0.000000e+00> : vector<1x16xf32>
    %35 = tpu.matmul %34, %33, %cst_20 {dimension_numbers = #tpu.dot_dimension_numbers<[1], [1], [0], [0], [0, 0, 1, 0], [], []>} : vector<1x128xbf16>, vector<16x128xbf16>, vector<1x16xf32> -> vector<1x16xf32>
    %c0_21 = arith.constant 0 : index
    %36 = memref.load %arg8[%c0_21] : memref<1xf32, #tpu.memory_space<smem>>
    %37 = vector.broadcast %36 : f32 to vector<1x16xf32>
    %38 = arith.addf %35, %37 : vector<1x16xf32>
    %39 = math.tanh %38 : vector<1x16xf32>
    %c0_22 = arith.constant 0 : index
    %c0_23 = arith.constant 0 : index
    %40 = vector.load %arg9[%c0_22, %c0_23] : memref<1x16xf32, #tpu.memory_space<vmem>>, vector<1x16xf32>
    tpu.vector_store %arg9[%c0_22, %c0_23], %39 {strides = array<i32>} : memref<1x16xf32, #tpu.memory_space<vmem>>, vector<1x16xf32>,
    return
  }
  func.func @transform_0(%arg0: i32) -> (i32, i32) {
    %c0_i32 = arith.constant 0 : i32
    %c0_i32_0 = arith.constant 0 : i32
    return %arg0, %c0_i32 : i32, i32
  }
  func.func @transform_1(%arg0: i32) -> (i32, i32) {
    %c0_i32 = arith.constant 0 : i32
    %c0_i32_0 = arith.constant 0 : i32
    %c0_i32_1 = arith.constant 0 : i32
    return %c0_i32, %c0_i32_0 : i32, i32
  }
  func.func @transform_2(%arg0: i32) -> (i32, i32) {
    %c0_i32 = arith.constant 0 : i32
    %c0_i32_0 = arith.constant 0 : i32
    %c0_i32_1 = arith.constant 0 : i32
    return %c0_i32, %c0_i32_0 : i32, i32
  }
  func.func @transform_3(%arg0: i32) -> (i32, i32) {
    %c0_i32 = arith.constant 0 : i32
    %c0_i32_0 = arith.constant 0 : i32
    %c0_i32_1 = arith.constant 0 : i32
    return %c0_i32, %c0_i32_0 : i32, i32
  }
  func.func @transform_4(%arg0: i32) -> (i32, i32) {
    %c0_i32 = arith.constant 0 : i32
    %c0_i32_0 = arith.constant 0 : i32
    %c0_i32_1 = arith.constant 0 : i32
    return %c0_i32, %c0_i32_0 : i32, i32
  }
  func.func @transform_5(%arg0: i32) -> (i32, i32) {
    %c0_i32 = arith.constant 0 : i32
    %c0_i32_0 = arith.constant 0 : i32
    %c0_i32_1 = arith.constant 0 : i32
    return %c0_i32, %c0_i32_0 : i32, i32
  }
  func.func @transform_6(%arg0: i32) -> (i32, i32) {
    %c0_i32 = arith.constant 0 : i32
    %c0_i32_0 = arith.constant 0 : i32
    %c0_i32_1 = arith.constant 0 : i32
    return %c0_i32, %c0_i32_0 : i32, i32
  }
  func.func @transform_7(%arg0: i32) -> i32 {
    %c0_i32 = arith.constant 0 : i32
    %c0_i32_0 = arith.constant 0 : i32
    return %c0_i32 : i32
  }
  func.func @transform_8(%arg0: i32) -> (i32, i32) {
    %c0_i32 = arith.constant 0 : i32
    %c0_i32_0 = arith.constant 0 : i32
    return %c0_i32, %arg0 : i32, i32
  }
}

</mosaic_0001>

<llo_original>
// kernel: tpu_custom_call.1
$region0: #{tpu_custom_call.1}
  #allocation0 [shape = 'u32[]', space=smem, size = 0x4, offset = 0x4, fixed_abs, tag = 'smem constant byte address 0x4 - core index']
  #allocation1 [shape = 'u32[72,128]{1,0:T(1,128)}', space=vmem, size = 0x9000, scoped, tag = 'internal scratch']
  #allocation2 [shape = 'f32[1]{0:T(128)S(6)}', space=smem, size = 0x200, scoped, tag = 'scoped memory for tpu_custom_call.1']
  %s0 = inlined_call_operand.vmem [shape: bf16[16,8], index: 0, kind: input, shape index: {}]
  %s1 = inlined_call_operand.vmem [shape: bf16[8,128], index: 1, kind: input, shape index: {}]
  %s2 = inlined_call_operand.hbm [shape: bf16[128,128], index: 2, kind: input, shape index: {}]
  %s3 = inlined_call_operand.hbm [shape: bf16[128,128], index: 3, kind: input, shape index: {}]
  %s4 = inlined_call_operand.hbm [shape: bf16[128,128], index: 4, kind: input, shape index: {}]
  %s5 = inlined_call_operand.vmem [shape: bf16[1,128], index: 5, kind: input, shape index: {}]
  %s6 = inlined_call_operand.vmem [shape: f32[4,128], index: 6, kind: input, shape index: {}]
  %s7 = inlined_call_operand.<no memory space> [shape: f32[1], index: 7, kind: input, shape index: {}]
  %s8 = inlined_call_operand.hbm [shape: f32[1,16], index: 8, kind: output, shape index: {}]
  %s9 = sld [smem:[#allocation0]]
  $region54: #{tpu_custom_call.1} parent=0
    _
  %s11 = ssub.s32 1, %s9
  %s12 = scalar_select 0, %s11, %s9
  %13 = sst [smem:[#allocation2]] %s7
  $region1: #{tpu_custom_call.1} parent=0
    #allocation3 [shape = 'u8[32768]{0}', space=vmem, size = 0x8000, scoped, tag = 'input window, operand 2, single buffered']
    #allocation4 [shape = 's32[1]{0}', space=sflag, size = 0x4, scoped, tag = 'scoped memory for tpu_custom_call.1']
    #allocation5 [shape = 's32[1]{0}', space=sflag, size = 0x4, scoped, tag = 'scoped memory for tpu_custom_call.1']
    #allocation6 [shape = 'u8[32768]{0}', space=vmem, size = 0x8000, scoped, tag = 'input window, operand 3, single buffered']
    #allocation7 [shape = 's32[1]{0}', space=sflag, size = 0x4, scoped, tag = 'scoped memory for tpu_custom_call.1']
    #allocation8 [shape = 'u8[32768]{0}', space=vmem, size = 0x8000, scoped, tag = 'input window, operand 4, single buffered']
    #allocation9 [shape = 'u8[512]{0}', space=vmem, size = 0x400, scoped, tag = 'output window, operand 0, single buffered']
    %14 = vsyncpa [#allocation4], 0
    %15 = vsyncpa [#allocation7], 0
    %16 = vsyncpa [#allocation5], 0
    // Predicated region
    $region2: #{tpu_custom_call.1} parent=1 // pred_check
      _
    $region3: #{tpu_custom_call.1} parent=1 // pred_check_branch
      %18 = sbr.rel (0) target = $region5
    $region4: #{tpu_custom_call.1} parent=1 // pred_region
      _
    $region5: #{tpu_custom_call.1} parent=1 // pred_fallthru
      _
    // Predicated region
    $region6: #{tpu_custom_call.1} parent=1 // pred_check
      _
    $region7: #{tpu_custom_call.1} parent=1 // pred_check_branch
      %20 = sbr.rel (0) target = $region9
    $region8: #{tpu_custom_call.1} parent=1 // pred_region
      _
    $region9: #{tpu_custom_call.1} parent=1 // pred_fallthru
      _
    // Predicated region
    $region10: #{tpu_custom_call.1} parent=1 // pred_check
      _
    $region11: #{tpu_custom_call.1} parent=1 // pred_check_branch
      %22 = sbr.rel (0) target = $region13
    $region12: #{tpu_custom_call.1} parent=1 // pred_region
      %24 = vsyncadd [#allocation4], 0
      %s25 = sshll.u32 %s2, 4
      %s26 = int_to_ptr.hbm [resolvable:$true] %s25
      %s27 = sshll.u32 [#allocation3], 4
      %s28 = int_to_ptr.vmem [resolvable:$true] %s27
      %33 = dma.hbm_to_vmem [thread:$0]  %s26, 1024, %s28, [#allocation4], 64, 64, 4
    $region13: #{tpu_custom_call.1} parent=1 // pred_fallthru
      _
    // Predicated region
    $region14: #{tpu_custom_call.1} parent=1 // pred_check
      _
    $region15: #{tpu_custom_call.1} parent=1 // pred_check_branch
      %35 = sbr.rel (0) target = $region17
    $region16: #{tpu_custom_call.1} parent=1 // pred_region
      %37 = vsyncadd [#allocation7], 0
      %s38 = sshll.u32 %s3, 4
      %s39 = int_to_ptr.hbm [resolvable:$true] %s38
      %s40 = sshll.u32 [#allocation6], 4
      %s41 = int_to_ptr.vmem [resolvable:$true] %s40
      %46 = dma.hbm_to_vmem [thread:$0]  %s39, 1024, %s41, [#allocation7], 64, 64, 4
    $region17: #{tpu_custom_call.1} parent=1 // pred_fallthru
      _
    // Predicated region
    $region18: #{tpu_custom_call.1} parent=1 // pred_check
      _
    $region19: #{tpu_custom_call.1} parent=1 // pred_check_branch
      %48 = sbr.rel (0) target = $region21
    $region20: #{tpu_custom_call.1} parent=1 // pred_region
      %50 = vsyncadd [#allocation7], 0
      %s51 = sshll.u32 %s4, 4
      %s52 = int_to_ptr.hbm [resolvable:$true] %s51
      %s53 = sshll.u32 [#allocation8], 4
      %s54 = int_to_ptr.vmem [resolvable:$true] %s53
      %59 = dma.hbm_to_vmem [thread:$0]  %s52, 1024, %s54, [#allocation7], 64, 64, 4
    $region21: #{tpu_custom_call.1} parent=1 // pred_fallthru
      _
    // Predicated region
    $region22: #{tpu_custom_call.1} parent=1 // pred_check
      _
    $region23: #{tpu_custom_call.1} parent=1 // pred_check_branch
      %61 = sbr.rel (0) target = $region25
    $region24: #{tpu_custom_call.1} parent=1 // pred_region
      _
    $region25: #{tpu_custom_call.1} parent=1 // pred_fallthru
      _
    // Predicated region
    $region26: #{tpu_custom_call.1} parent=1 // pred_check
      _
    $region27: #{tpu_custom_call.1} parent=1 // pred_check_branch
      %63 = sbr.rel (0) target = $region29
    $region28: #{tpu_custom_call.1} parent=1 // pred_region
      _
    $region29: #{tpu_custom_call.1} parent=1 // pred_fallthru
      _
    // Predicated region
    $region30: #{tpu_custom_call.1} parent=1 // pred_check
      _
    $region31: #{tpu_custom_call.1} parent=1 // pred_check_branch
      %65 = sbr.rel (0) target = $region33
    $region32: #{tpu_custom_call.1} parent=1 // pred_region
      _
    $region33: #{tpu_custom_call.1} parent=1 // pred_fallthru
      _
    // Predicated region
    $region34: #{tpu_custom_call.1} parent=1 // pred_check
      _
    $region35: #{tpu_custom_call.1} parent=1 // pred_check_branch
      %67 = sbr.rel (0) target = $region37
    $region36: #{tpu_custom_call.1} parent=1 // pred_region
      %69 = dma.done [#allocation4], 1024
    $region37: #{tpu_custom_call.1} parent=1 // pred_fallthru
      _
    // Predicated region
    $region38: #{tpu_custom_call.1} parent=1 // pred_check
      _
    $region39: #{tpu_custom_call.1} parent=1 // pred_check_branch
      %71 = sbr.rel (0) target = $region41
    $region40: #{tpu_custom_call.1} parent=1 // pred_region
      %73 = dma.done [#allocation7], 1024
    $region41: #{tpu_custom_call.1} parent=1 // pred_fallthru
      _
    // Predicated region
    $region42: #{tpu_custom_call.1} parent=1 // pred_check
      _
    $region43: #{tpu_custom_call.1} parent=1 // pred_check_branch
      %75 = sbr.rel (0) target = $region45
    $region44: #{tpu_custom_call.1} parent=1 // pred_region
      %77 = dma.done [#allocation7], 1024
    $region45: #{tpu_custom_call.1} parent=1 // pred_fallthru
      _
    %v79 = vld [vmem:[%s6] sm:$0xf]
    %v80 = vld [vmem:[%s0] sm:$0xf]
    %v81 = vld [vmem:[%s0 + $0x4] sm:$0xf]
    %v82 = vld [vmem:[%s1] sm:$0xf]
    %v83 = vperm.slane %v79, 0
    %v86 = vunpack.c.l.b16 %v80
    %v87 = vunpack.c.l.b16 %v81
    %v88 = vpack.c.b16 %v87, %v86
    %vm89 = vcmask 64512
    %v91 = vsel %vm89, %v88, 0
    %vm93 = vcmask 1043456
    %v95 = vsel %vm93, %v82, 0
    %97 = vmatpush.bf16.msra.mxu0 0
    %98 = vmatpush.bf16.msra.mxu0 0
    %99 = vmatpush.bf16.msra.mxu0 0
    %100 = vmatpush.bf16.msra.mxu0 0
    %101 = vmatpush.bf16.msra.mxu0 0
    %102 = vmatpush.bf16.msra.mxu0 0
    %103 = vmatpush.bf16.msra.mxu0 0
    %104 = vmatpush.bf16.msra.mxu0 %v95
    %105 = vmatmul.bf16.gmra.mxu0 %v91
    %v106 = vpop.f32.mrf.mxu0
    %v107 = vadd.f32 %v83, %v106
    %v108 = vpop.f32.mrf.mxu0
    %v109 = vadd.f32 %v83, %v108
    %110 = vdwg.mxu0
    %v111 = vmax.f32 %v107, 0.0
    %v112 = vmax.f32 %v109, 0.0
    %v113 = vpack.c.bf16 %v112, %v111
    %v114 = vld [vmem:[#allocation3] sm:$0xf]
    %v115 = vld [vmem:[#allocation3 + $0x4] sm:$0xf]
    %v116 = vld [vmem:[#allocation3 + $0x8] sm:$0xf]
    %v117 = vld [vmem:[#allocation3 + $0xc] sm:$0xf]
    %v118 = vld [vmem:[#allocation3 + $0x10] sm:$0xf]
    %v119 = vld [vmem:[#allocation3 + $0x14] sm:$0xf]
    %v120 = vld [vmem:[#allocation3 + $0x18] sm:$0xf]
    %v121 = vld [vmem:[#allocation3 + $0x1c] sm:$0xf]
    %v122 = vld [vmem:[#allocation3 + $0x20] sm:$0xf]
    %v123 = vld [vmem:[#allocation3 + $0x24] sm:$0xf]
    %v124 = vld [vmem:[#allocation3 + $0x28] sm:$0xf]
    %v125 = vld [vmem:[#allocation3 + $0x2c] sm:$0xf]
    %v126 = vld [vmem:[#allocation3 + $0x30] sm:$0xf]
    %v127 = vld [vmem:[#allocation3 + $0x34] sm:$0xf]
    %v128 = vld [vmem:[#allocation3 + $0x38] sm:$0xf]
    %v129 = vld [vmem:[#allocation3 + $0x3c] sm:$0xf]
    %v130 = vperm.slane %v79, 1
    %v147 = vunpack.c.l.b16 %v114
    %v148 = vunpack.c.l.b16 %v115
    %v149 = vunpack.c.l.b16 %v116
    %v150 = vunpack.c.l.b16 %v117
    %v151 = vunpack.c.l.b16 %v118
    %v152 = vunpack.c.l.b16 %v119
    %v153 = vunpack.c.l.b16 %v120
    %v154 = vunpack.c.l.b16 %v121
    %v155 = vunpack.c.l.b16 %v122
    %v156 = vunpack.c.l.b16 %v123
    %v157 = vunpack.c.l.b16 %v124
    %v158 = vunpack.c.l.b16 %v125
    %v159 = vunpack.c.l.b16 %v126
    %v160 = vunpack.c.l.b16 %v127
    %v161 = vunpack.c.l.b16 %v128
    %v162 = vunpack.c.l.b16 %v129
    %v163 = vpack.c.b16 %v148, %v147
    %v164 = vpack.c.b16 %v150, %v149
    %v165 = vpack.c.b16 %v152, %v151
    %v166 = vpack.c.b16 %v154, %v153
    %v167 = vpack.c.b16 %v156, %v155
    %v168 = vpack.c.b16 %v158, %v157
    %v169 = vpack.c.b16 %v160, %v159
    %v170 = vpack.c.b16 %v162, %v161
    %179 = vmatpush.bf16.msra.mxu0 %v170
    %180 = vmatpush.bf16.msra.mxu0 %v169
    %181 = vmatpush.bf16.msra.mxu0 %v168
    %182 = vmatpush.bf16.msra.mxu0 %v167
    %183 = vmatpush.bf16.msra.mxu0 %v166
    %184 = vmatpush.bf16.msra.mxu0 %v165
    %185 = vmatpush.bf16.msra.mxu0 %v164
    %186 = vmatpush.bf16.msra.mxu0 %v163
    %187 = vmatmul.bf16.gmra.mxu0 %v113
    %v188 = vpop.f32.mrf.mxu0
    %v189 = vadd.f32 %v130, %v188
    %v190 = vpop.f32.mrf.mxu0
    %v191 = vadd.f32 %v130, %v190
    %192 = vdwg.mxu0
    %v193 = vmax.f32 %v189, 0.0
    %v194 = vmax.f32 %v191, 0.0
    %v195 = vpack.c.bf16 %v194, %v193
    %v196 = vld [vmem:[#allocation6] sm:$0xf]
    %v197 = vld [vmem:[#allocation6 + $0x4] sm:$0xf]
    %v198 = vld [vmem:[#allocation6 + $0x8] sm:$0xf]
    %v199 = vld [vmem:[#allocation6 + $0xc] sm:$0xf]
    %v200 = vld [vmem:[#allocation6 + $0x10] sm:$0xf]
    %v201 = vld [vmem:[#allocation6 + $0x14] sm:$0xf]
    %v202 = vld [vmem:[#allocation6 + $0x18] sm:$0xf]
    %v203 = vld [vmem:[#allocation6 + $0x1c] sm:$0xf]
    %v204 = vld [vmem:[#allocation6 + $0x20] sm:$0xf]
    %v205 = vld [vmem:[#allocation6 + $0x24] sm:$0xf]
    %v206 = vld [vmem:[#allocation6 + $0x28] sm:$0xf]
    %v207 = vld [vmem:[#allocation6 + $0x2c] sm:$0xf]
    %v208 = vld [vmem:[#allocation6 + $0x30] sm:$0xf]
    %v209 = vld [vmem:[#allocation6 + $0x34] sm:$0xf]
    %v210 = vld [vmem:[#allocation6 + $0x38] sm:$0xf]
    %v211 = vld [vmem:[#allocation6 + $0x3c] sm:$0xf]
    %v212 = vperm.slane %v79, 2
    %v229 = vunpack.c.l.b16 %v196
    %v230 = vunpack.c.l.b16 %v197
    %v231 = vunpack.c.l.b16 %v198
    %v232 = vunpack.c.l.b16 %v199
    %v233 = vunpack.c.l.b16 %v200
    %v234 = vunpack.c.l.b16 %v201
    %v235 = vunpack.c.l.b16 %v202
    %v236 = vunpack.c.l.b16 %v203
    %v237 = vunpack.c.l.b16 %v204
    %v238 = vunpack.c.l.b16 %v205
    %v239 = vunpack.c.l.b16 %v206
    %v240 = vunpack.c.l.b16 %v207
    %v241 = vunpack.c.l.b16 %v208
    %v242 = vunpack.c.l.b16 %v209
    %v243 = vunpack.c.l.b16 %v210
    %v244 = vunpack.c.l.b16 %v211
    %v245 = vpack.c.b16 %v230, %v229
    %v246 = vpack.c.b16 %v232, %v231
    %v247 = vpack.c.b16 %v234, %v233
    %v248 = vpack.c.b16 %v236, %v235
    %v249 = vpack.c.b16 %v238, %v237
    %v250 = vpack.c.b16 %v240, %v239
    %v251 = vpack.c.b16 %v242, %v241
    %v252 = vpack.c.b16 %v244, %v243
    %261 = vmatpush.bf16.msra.mxu0 %v252
    %262 = vmatpush.bf16.msra.mxu0 %v251
    %263 = vmatpush.bf16.msra.mxu0 %v250
    %264 = vmatpush.bf16.msra.mxu0 %v249
    %265 = vmatpush.bf16.msra.mxu0 %v248
    %266 = vmatpush.bf16.msra.mxu0 %v247
    %267 = vmatpush.bf16.msra.mxu0 %v246
    %268 = vmatpush.bf16.msra.mxu0 %v245
    %269 = vmatmul.bf16.gmra.mxu0 %v195
    %v270 = vpop.f32.mrf.mxu0
    %v271 = vadd.f32 %v212, %v270
    %v272 = vpop.f32.mrf.mxu0
    %v273 = vadd.f32 %v212, %v272
    %274 = vdwg.mxu0
    %v275 = vmax.f32 %v271, 0.0
    %v276 = vmax.f32 %v273, 0.0
    %v277 = vpack.c.bf16 %v276, %v275
    %v278 = vld [vmem:[#allocation8] sm:$0xf]
    %v279 = vld [vmem:[#allocation8 + $0x4] sm:$0xf]
    %v280 = vld [vmem:[#allocation8 + $0x8] sm:$0xf]
    %v281 = vld [vmem:[#allocation8 + $0xc] sm:$0xf]
    %v282 = vld [vmem:[#allocation8 + $0x10] sm:$0xf]
    %v283 = vld [vmem:[#allocation8 + $0x14] sm:$0xf]
    %v284 = vld [vmem:[#allocation8 + $0x18] sm:$0xf]
    %v285 = vld [vmem:[#allocation8 + $0x1c] sm:$0xf]
    %v286 = vld [vmem:[#allocation8 + $0x20] sm:$0xf]
    %v287 = vld [vmem:[#allocation8 + $0x24] sm:$0xf]
    %v288 = vld [vmem:[#allocation8 + $0x28] sm:$0xf]
    %v289 = vld [vmem:[#allocation8 + $0x2c] sm:$0xf]
    %v290 = vld [vmem:[#allocation8 + $0x30] sm:$0xf]
    %v291 = vld [vmem:[#allocation8 + $0x34] sm:$0xf]
    %v292 = vld [vmem:[#allocation8 + $0x38] sm:$0xf]
    %v293 = vld [vmem:[#allocation8 + $0x3c] sm:$0xf]
    %v294 = vperm.slane %v79, 3
    %v311 = vunpack.c.l.b16 %v278
    %v312 = vunpack.c.l.b16 %v279
    %v313 = vunpack.c.l.b16 %v280
    %v314 = vunpack.c.l.b16 %v281
    %v315 = vunpack.c.l.b16 %v282
    %v316 = vunpack.c.l.b16 %v283
    %v317 = vunpack.c.l.b16 %v284
    %v318 = vunpack.c.l.b16 %v285
    %v319 = vunpack.c.l.b16 %v286
    %v320 = vunpack.c.l.b16 %v287
    %v321 = vunpack.c.l.b16 %v288
    %v322 = vunpack.c.l.b16 %v289
    %v323 = vunpack.c.l.b16 %v290
    %v324 = vunpack.c.l.b16 %v291
    %v325 = vunpack.c.l.b16 %v292
    %v326 = vunpack.c.l.b16 %v293
    %v327 = vpack.c.b16 %v312, %v311
    %v328 = vpack.c.b16 %v314, %v313
    %v329 = vpack.c.b16 %v316, %v315
    %v330 = vpack.c.b16 %v318, %v317
    %v331 = vpack.c.b16 %v320, %v319
    %v332 = vpack.c.b16 %v322, %v321
    %v333 = vpack.c.b16 %v324, %v323
    %v334 = vpack.c.b16 %v326, %v325
    %343 = vmatpush.bf16.msra.mxu0 %v334
    %344 = vmatpush.bf16.msra.mxu0 %v333
    %345 = vmatpush.bf16.msra.mxu0 %v332
    %346 = vmatpush.bf16.msra.mxu0 %v331
    %347 = vmatpush.bf16.msra.mxu0 %v330
    %348 = vmatpush.bf16.msra.mxu0 %v329
    %349 = vmatpush.bf16.msra.mxu0 %v328
    %350 = vmatpush.bf16.msra.mxu0 %v327
    %351 = vmatmul.bf16.gmra.mxu0 %v277
    %v352 = vpop.f32.mrf.mxu0
    %v353 = vadd.f32 %v294, %v352
    %v354 = vpop.f32.mrf.mxu0
    %v355 = vadd.f32 %v294, %v354
    %356 = vdwg.mxu0
    %v357 = vmax.f32 %v353, 0.0
    %v358 = vmax.f32 %v355, 0.0
    %v359 = vpack.c.bf16 %v358, %v357
    %v360 = vld [vmem:[%s5] sm:$0x1]
    %s361 = sld [smem:[#allocation2]]
    %v362 = vstv %s361
    %363 = vmatpush.bf16.xpose.msra.mxu0 0
    %364 = vmatpush.bf16.xpose.msra.mxu0 0
    %365 = vmatpush.bf16.xpose.msra.mxu0 0
    %366 = vmatpush.bf16.xpose.msra.mxu0 0
    %367 = vmatpush.bf16.xpose.msra.mxu0 0
    %368 = vmatpush.bf16.xpose.msra.mxu0 0
    %369 = vmatpush.bf16.xpose.msra.mxu0 0
    %370 = vmatpush.bf16.xpose.msra.mxu0 %v359
    %371 = vmatmul.bf16.gmra.mxu0 %v360
    %v372 = vpop.f32.mrf.mxu0
    %v373 = vadd.f32 %v362, %v372
    %v374 = vpop.f32.mrf.mxu0
    %375 = vdwg.mxu0
    %v376 = vtanh.pop %v373
    %vm377 = vcmask 122880
    %378 = vst.msk [vmem:[#allocation9] sm:$0x1] %vm377, %v376
    // Predicated region
    $region46: #{tpu_custom_call.1} parent=1 // pred_check
      _
    $region47: #{tpu_custom_call.1} parent=1 // pred_check_branch
      %380 = sbr.rel (0) target = $region49
    $region48: #{tpu_custom_call.1} parent=1 // pred_region
      %382 = vsyncadd [#allocation5], 0
      %s384 = sshll.u32 [#allocation9], 4
      %s385 = int_to_ptr.vmem [resolvable:$true] %s384
      %s386 = sshll.u32 %s8, 4
      %s387 = int_to_ptr.hbm [resolvable:$true] %s386
      %389 = dma.vmem_to_hbm [thread:$0]  %s385, 16, %s387, [#allocation5]
    $region49: #{tpu_custom_call.1} parent=1 // pred_fallthru
      _
    // Predicated region
    $region50: #{tpu_custom_call.1} parent=1 // pred_check
      _
    $region51: #{tpu_custom_call.1} parent=1 // pred_check_branch
      %391 = sbr.rel (0) target = $region53
    $region52: #{tpu_custom_call.1} parent=1 // pred_region
      %393 = dma.done [#allocation5], 16
    $region53: #{tpu_custom_call.1} parent=1 // pred_fallthru
      _
    %394 = vsyncpa [#allocation4], 1
    %395 = vsyncpa [#allocation7], 1
    %396 = vsyncpa [#allocation5], 1

// kernel: tpu_custom_call.1
$region0: #{tpu_custom_call.1}
  #allocation0 [shape = 'u32[]', space=smem, size = 0x4, offset = 0x4, fixed_abs, tag = 'smem constant byte address 0x4 - core index']
  #allocation1 [shape = 'u32[72,128]{1,0:T(1,128)}', space=vmem, size = 0x9000, scoped, tag = 'internal scratch']
  #allocation2 [shape = 'f32[1]{0:T(128)S(6)}', space=smem, size = 0x200, scoped, tag = 'scoped memory for tpu_custom_call.1']
  %s0 = inlined_call_operand.vmem [shape: bf16[16,8], index: 0, kind: input, shape index: {}]
  %s1 = inlined_call_operand.vmem [shape: bf16[8,128], index: 1, kind: input, shape index: {}]
  %s2 = inlined_call_operand.hbm [shape: bf16[128,128], index: 2, kind: input, shape index: {}]
  %s3 = inlined_call_operand.hbm [shape: bf16[128,128], index: 3, kind: input, shape index: {}]
  %s4 = inlined_call_operand.hbm [shape: bf16[128,128], index: 4, kind: input, shape index: {}]
  %s5 = inlined_call_operand.vmem [shape: bf16[1,128], index: 5, kind: input, shape index: {}]
  %s6 = inlined_call_operand.vmem [shape: f32[4,128], index: 6, kind: input, shape index: {}]
  %s7 = inlined_call_operand.<no memory space> [shape: f32[1], index: 7, kind: input, shape index: {}]
  %s8 = inlined_call_operand.hbm [shape: f32[1,16], index: 8, kind: output, shape index: {}]
  %s9 = sld [smem:[#allocation0]]
  $region54: #{tpu_custom_call.1} parent=0
    _
  %s11 = ssub.s32 1, %s9
  %s12 = scalar_select 0, %s11, %s9
  %13 = sst [smem:[#allocation2]] %s7
  $region1: #{tpu_custom_call.1} parent=0
    #allocation3 [shape = 'u8[32768]{0}', space=vmem, size = 0x8000, scoped, tag = 'input window, operand 2, single buffered']
    #allocation4 [shape = 's32[1]{0}', space=sflag, size = 0x4, scoped, tag = 'scoped memory for tpu_custom_call.1']
    #allocation5 [shape = 's32[1]{0}', space=sflag, size = 0x4, scoped, tag = 'scoped memory for tpu_custom_call.1']
    #allocation6 [shape = 'u8[32768]{0}', space=vmem, size = 0x8000, scoped, tag = 'input window, operand 3, single buffered']
    #allocation7 [shape = 's32[1]{0}', space=sflag, size = 0x4, scoped, tag = 'scoped memory for tpu_custom_call.1']
    #allocation8 [shape = 'u8[32768]{0}', space=vmem, size = 0x8000, scoped, tag = 'input window, operand 4, single buffered']
    #allocation9 [shape = 'u8[512]{0}', space=vmem, size = 0x400, scoped, tag = 'output window, operand 0, single buffered']
    %14 = vsyncpa [#allocation4], 0
    %15 = vsyncpa [#allocation7], 0
    %16 = vsyncpa [#allocation5], 0
    // Predicated region
    $region2: #{tpu_custom_call.1} parent=1 // pred_check
      _
    $region3: #{tpu_custom_call.1} parent=1 // pred_check_branch
      %18 = sbr.rel (0) target = $region5
    $region4: #{tpu_custom_call.1} parent=1 // pred_region
      _
    $region5: #{tpu_custom_call.1} parent=1 // pred_fallthru
      _
    // Predicated region
    $region6: #{tpu_custom_call.1} parent=1 // pred_check
      _
    $region7: #{tpu_custom_call.1} parent=1 // pred_check_branch
      %20 = sbr.rel (0) target = $region9
    $region8: #{tpu_custom_call.1} parent=1 // pred_region
      _
    $region9: #{tpu_custom_call.1} parent=1 // pred_fallthru
      _
    // Predicated region
    $region10: #{tpu_custom_call.1} parent=1 // pred_check
      _
    $region11: #{tpu_custom_call.1} parent=1 // pred_check_branch
      %22 = sbr.rel (0) target = $region13
    $region12: #{tpu_custom_call.1} parent=1 // pred_region
      %24 = vsyncadd [#allocation4], 0
      %s25 = sshll.u32 %s2, 4
      %s26 = int_to_ptr.hbm [resolvable:$true] %s25
      %s27 = sshll.u32 [#allocation3], 4
      %s28 = int_to_ptr.vmem [resolvable:$true] %s27
      %33 = dma.hbm_to_vmem [thread:$0]  %s26, 1024, %s28, [#allocation4], 64, 64, 4
    $region13: #{tpu_custom_call.1} parent=1 // pred_fallthru
      _
    // Predicated region
    $region14: #{tpu_custom_call.1} parent=1 // pred_check
      _
    $region15: #{tpu_custom_call.1} parent=1 // pred_check_branch
      %35 = sbr.rel (0) target = $region17
    $region16: #{tpu_custom_call.1} parent=1 // pred_region
      %37 = vsyncadd [#allocation7], 0
      %s38 = sshll.u32 %s3, 4
      %s39 = int_to_ptr.hbm [resolvable:$true] %s38
      %s40 = sshll.u32 [#allocation6], 4
      %s41 = int_to_ptr.vmem [resolvable:$true] %s40
      %46 = dma.hbm_to_vmem [thread:$0]  %s39, 1024, %s41, [#allocation7], 64, 64, 4
    $region17: #{tpu_custom_call.1} parent=1 // pred_fallthru
      _
    // Predicated region
    $region18: #{tpu_custom_call.1} parent=1 // pred_check
      _
    $region19: #{tpu_custom_call.1} parent=1 // pred_check_branch
      %48 = sbr.rel (0) target = $region21
    $region20: #{tpu_custom_call.1} parent=1 // pred_region
      %50 = vsyncadd [#allocation7], 0
      %s51 = sshll.u32 %s4, 4
      %s52 = int_to_ptr.hbm [resolvable:$true] %s51
      %s53 = sshll.u32 [#allocation8], 4
      %s54 = int_to_ptr.vmem [resolvable:$true] %s53
      %59 = dma.hbm_to_vmem [thread:$0]  %s52, 1024, %s54, [#allocation7], 64, 64, 4
    $region21: #{tpu_custom_call.1} parent=1 // pred_fallthru
      _
    // Predicated region
    $region22: #{tpu_custom_call.1} parent=1 // pred_check
      _
    $region23: #{tpu_custom_call.1} parent=1 // pred_check_branch
      %61 = sbr.rel (0) target = $region25
    $region24: #{tpu_custom_call.1} parent=1 // pred_region
      _
    $region25: #{tpu_custom_call.1} parent=1 // pred_fallthru
      _
    // Predicated region
    $region26: #{tpu_custom_call.1} parent=1 // pred_check
      _
    $region27: #{tpu_custom_call.1} parent=1 // pred_check_branch
      %63 = sbr.rel (0) target = $region29
    $region28: #{tpu_custom_call.1} parent=1 // pred_region
      _
    $region29: #{tpu_custom_call.1} parent=1 // pred_fallthru
      _
    // Predicated region
    $region30: #{tpu_custom_call.1} parent=1 // pred_check
      _
    $region31: #{tpu_custom_call.1} parent=1 // pred_check_branch
      %65 = sbr.rel (0) target = $region33
    $region32: #{tpu_custom_call.1} parent=1 // pred_region
      _
    $region33: #{tpu_custom_call.1} parent=1 // pred_fallthru
      _
    // Predicated region
    $region34: #{tpu_custom_call.1} parent=1 // pred_check
      _
    $region35: #{tpu_custom_call.1} parent=1 // pred_check_branch
      %67 = sbr.rel (0) target = $region37
    $region36: #{tpu_custom_call.1} parent=1 // pred_region
      %69 = dma.done [#allocation4], 1024
    $region37: #{tpu_custom_call.1} parent=1 // pred_fallthru
      _
    // Predicated region
    $region38: #{tpu_custom_call.1} parent=1 // pred_check
      _
    $region39: #{tpu_custom_call.1} parent=1 // pred_check_branch
      %71 = sbr.rel (0) target = $region41
    $region40: #{tpu_custom_call.1} parent=1 // pred_region
      %73 = dma.done [#allocation7], 1024
    $region41: #{tpu_custom_call.1} parent=1 // pred_fallthru
      _
    // Predicated region
    $region42: #{tpu_custom_call.1} parent=1 // pred_check
      _
    $region43: #{tpu_custom_call.1} parent=1 // pred_check_branch
      %75 = sbr.rel (0) target = $region45
    $region44: #{tpu_custom_call.1} parent=1 // pred_region
      %77 = dma.done [#allocation7], 1024
    $region45: #{tpu_custom_call.1} parent=1 // pred_fallthru
      _
    %v79 = vld [vmem:[%s6] sm:$0xf]
    %v80 = vld [vmem:[%s0] sm:$0xf]
    %v81 = vld [vmem:[%s0 + $0x4] sm:$0xf]
    %v82 = vld [vmem:[%s1] sm:$0xf]
    %v83 = vperm.slane %v79, 0
    %v86 = vunpack.c.l.b16 %v80
    %v87 = vunpack.c.l.b16 %v81
    %v88 = vpack.c.b16 %v87, %v86
    %vm89 = vcmask 64512
    %v91 = vsel %vm89, %v88, 0
    %vm93 = vcmask 1043456
    %v95 = vsel %vm93, %v82, 0
    %97 = vmatpush.bf16.msra.mxu0 0
    %98 = vmatpush.bf16.msra.mxu0 0
    %99 = vmatpush.bf16.msra.mxu0 0
    %100 = vmatpush.bf16.msra.mxu0 0
    %101 = vmatpush.bf16.msra.mxu0 0
    %102 = vmatpush.bf16.msra.mxu0 0
    %103 = vmatpush.bf16.msra.mxu0 0
    %104 = vmatpush.bf16.msra.mxu0 %v95
    %105 = vmatmul.bf16.gmra.mxu0 %v91
    %v106 = vpop.f32.mrf.mxu0
    %v107 = vadd.f32 %v83, %v106
    %v108 = vpop.f32.mrf.mxu0
    %v109 = vadd.f32 %v83, %v108
    %110 = vdwg.mxu0
    %v111 = vmax.f32 %v107, 0.0
    %v112 = vmax.f32 %v109, 0.0
    %v113 = vpack.c.bf16 %v112, %v111
    %v114 = vld [vmem:[#allocation3] sm:$0xf]
    %v115 = vld [vmem:[#allocation3 + $0x4] sm:$0xf]
    %v116 = vld [vmem:[#allocation3 + $0x8] sm:$0xf]
    %v117 = vld [vmem:[#allocation3 + $0xc] sm:$0xf]
    %v118 = vld [vmem:[#allocation3 + $0x10] sm:$0xf]
    %v119 = vld [vmem:[#allocation3 + $0x14] sm:$0xf]
    %v120 = vld [vmem:[#allocation3 + $0x18] sm:$0xf]
    %v121 = vld [vmem:[#allocation3 + $0x1c] sm:$0xf]
    %v122 = vld [vmem:[#allocation3 + $0x20] sm:$0xf]
    %v123 = vld [vmem:[#allocation3 + $0x24] sm:$0xf]
    %v124 = vld [vmem:[#allocation3 + $0x28] sm:$0xf]
    %v125 = vld [vmem:[#allocation3 + $0x2c] sm:$0xf]
    %v126 = vld [vmem:[#allocation3 + $0x30] sm:$0xf]
    %v127 = vld [vmem:[#allocation3 + $0x34] sm:$0xf]
    %v128 = vld [vmem:[#allocation3 + $0x38] sm:$0xf]
    %v129 = vld [vmem:[#allocation3 + $0x3c] sm:$0xf]
    %v130 = vperm.slane %v79, 1
    %v147 = vunpack.c.l.b16 %v114
    %v148 = vunpack.c.l.b16 %v115
    %v149 = vunpack.c.l.b16 %v116
    %v150 = vunpack.c.l.b16 %v117
    %v151 = vunpack.c.l.b16 %v118
    %v152 = vunpack.c.l.b16 %v119
    %v153 = vunpack.c.l.b16 %v120
    %v154 = vunpack.c.l.b16 %v121
    %v155 = vunpack.c.l.b16 %v122
    %v156 = vunpack.c.l.b16 %v123
    %v157 = vunpack.c.l.b16 %v124
    %v158 = vunpack.c.l.b16 %v125
    %v159 = vunpack.c.l.b16 %v126
    %v160 = vunpack.c.l.b16 %v127
    %v161 = vunpack.c.l.b16 %v128
    %v162 = vunpack.c.l.b16 %v129
    %v163 = vpack.c.b16 %v148, %v147
    %v164 = vpack.c.b16 %v150, %v149
    %v165 = vpack.c.b16 %v152, %v151
    %v166 = vpack.c.b16 %v154, %v153
    %v167 = vpack.c.b16 %v156, %v155
    %v168 = vpack.c.b16 %v158, %v157
    %v169 = vpack.c.b16 %v160, %v159
    %v170 = vpack.c.b16 %v162, %v161
    %179 = vmatpush.bf16.msra.mxu0 %v170
    %180 = vmatpush.bf16.msra.mxu0 %v169
    %181 = vmatpush.bf16.msra.mxu0 %v168
    %182 = vmatpush.bf16.msra.mxu0 %v167
    %183 = vmatpush.bf16.msra.mxu0 %v166
    %184 = vmatpush.bf16.msra.mxu0 %v165
    %185 = vmatpush.bf16.msra.mxu0 %v164
    %186 = vmatpush.bf16.msra.mxu0 %v163
    %187 = vmatmul.bf16.gmra.mxu0 %v113
    %v188 = vpop.f32.mrf.mxu0
    %v189 = vadd.f32 %v130, %v188
    %v190 = vpop.f32.mrf.mxu0
    %v191 = vadd.f32 %v130, %v190
    %192 = vdwg.mxu0
    %v193 = vmax.f32 %v189, 0.0
    %v194 = vmax.f32 %v191, 0.0
    %v195 = vpack.c.bf16 %v194, %v193
    %v196 = vld [vmem:[#allocation6] sm:$0xf]
    %v197 = vld [vmem:[#allocation6 + $0x4] sm:$0xf]
    %v198 = vld [vmem:[#allocation6 + $0x8] sm:$0xf]
    %v199 = vld [vmem:[#allocation6 + $0xc] sm:$0xf]
    %v200 = vld [vmem:[#allocation6 + $0x10] sm:$0xf]
    %v201 = vld [vmem:[#allocation6 + $0x14] sm:$0xf]
    %v202 = vld [vmem:[#allocation6 + $0x18] sm:$0xf]
    %v203 = vld [vmem:[#allocation6 + $0x1c] sm:$0xf]
    %v204 = vld [vmem:[#allocation6 + $0x20] sm:$0xf]
    %v205 = vld [vmem:[#allocation6 + $0x24] sm:$0xf]
    %v206 = vld [vmem:[#allocation6 + $0x28] sm:$0xf]
    %v207 = vld [vmem:[#allocation6 + $0x2c] sm:$0xf]
    %v208 = vld [vmem:[#allocation6 + $0x30] sm:$0xf]
    %v209 = vld [vmem:[#allocation6 + $0x34] sm:$0xf]
    %v210 = vld [vmem:[#allocation6 + $0x38] sm:$0xf]
    %v211 = vld [vmem:[#allocation6 + $0x3c] sm:$0xf]
    %v212 = vperm.slane %v79, 2
    %v229 = vunpack.c.l.b16 %v196
    %v230 = vunpack.c.l.b16 %v197
    %v231 = vunpack.c.l.b16 %v198
    %v232 = vunpack.c.l.b16 %v199
    %v233 = vunpack.c.l.b16 %v200
    %v234 = vunpack.c.l.b16 %v201
    %v235 = vunpack.c.l.b16 %v202
    %v236 = vunpack.c.l.b16 %v203
    %v237 = vunpack.c.l.b16 %v204
    %v238 = vunpack.c.l.b16 %v205
    %v239 = vunpack.c.l.b16 %v206
    %v240 = vunpack.c.l.b16 %v207
    %v241 = vunpack.c.l.b16 %v208
    %v242 = vunpack.c.l.b16 %v209
    %v243 = vunpack.c.l.b16 %v210
    %v244 = vunpack.c.l.b16 %v211
    %v245 = vpack.c.b16 %v230, %v229
    %v246 = vpack.c.b16 %v232, %v231
    %v247 = vpack.c.b16 %v234, %v233
    %v248 = vpack.c.b16 %v236, %v235
    %v249 = vpack.c.b16 %v238, %v237
    %v250 = vpack.c.b16 %v240, %v239
    %v251 = vpack.c.b16 %v242, %v241
    %v252 = vpack.c.b16 %v244, %v243
    %261 = vmatpush.bf16.msra.mxu0 %v252
    %262 = vmatpush.bf16.msra.mxu0 %v251
    %263 = vmatpush.bf16.msra.mxu0 %v250
    %264 = vmatpush.bf16.msra.mxu0 %v249
    %265 = vmatpush.bf16.msra.mxu0 %v248
    %266 = vmatpush.bf16.msra.mxu0 %v247
    %267 = vmatpush.bf16.msra.mxu0 %v246
    %268 = vmatpush.bf16.msra.mxu0 %v245
    %269 = vmatmul.bf16.gmra.mxu0 %v195
    %v270 = vpop.f32.mrf.mxu0
    %v271 = vadd.f32 %v212, %v270
    %v272 = vpop.f32.mrf.mxu0
    %v273 = vadd.f32 %v212, %v272
    %274 = vdwg.mxu0
    %v275 = vmax.f32 %v271, 0.0
    %v276 = vmax.f32 %v273, 0.0
    %v277 = vpack.c.bf16 %v276, %v275
    %v278 = vld [vmem:[#allocation8] sm:$0xf]
    %v279 = vld [vmem:[#allocation8 + $0x4] sm:$0xf]
    %v280 = vld [vmem:[#allocation8 + $0x8] sm:$0xf]
    %v281 = vld [vmem:[#allocation8 + $0xc] sm:$0xf]
    %v282 = vld [vmem:[#allocation8 + $0x10] sm:$0xf]
    %v283 = vld [vmem:[#allocation8 + $0x14] sm:$0xf]
    %v284 = vld [vmem:[#allocation8 + $0x18] sm:$0xf]
    %v285 = vld [vmem:[#allocation8 + $0x1c] sm:$0xf]
    %v286 = vld [vmem:[#allocation8 + $0x20] sm:$0xf]
    %v287 = vld [vmem:[#allocation8 + $0x24] sm:$0xf]
    %v288 = vld [vmem:[#allocation8 + $0x28] sm:$0xf]
    %v289 = vld [vmem:[#allocation8 + $0x2c] sm:$0xf]
    %v290 = vld [vmem:[#allocation8 + $0x30] sm:$0xf]
    %v291 = vld [vmem:[#allocation8 + $0x34] sm:$0xf]
    %v292 = vld [vmem:[#allocation8 + $0x38] sm:$0xf]
    %v293 = vld [vmem:[#allocation8 + $0x3c] sm:$0xf]
    %v294 = vperm.slane %v79, 3
    %v311 = vunpack.c.l.b16 %v278
    %v312 = vunpack.c.l.b16 %v279
    %v313 = vunpack.c.l.b16 %v280
    %v314 = vunpack.c.l.b16 %v281
    %v315 = vunpack.c.l.b16 %v282
    %v316 = vunpack.c.l.b16 %v283
    %v317 = vunpack.c.l.b16 %v284
    %v318 = vunpack.c.l.b16 %v285
    %v319 = vunpack.c.l.b16 %v286
    %v320 = vunpack.c.l.b16 %v287
    %v321 = vunpack.c.l.b16 %v288
    %v322 = vunpack.c.l.b16 %v289
    %v323 = vunpack.c.l.b16 %v290
    %v324 = vunpack.c.l.b16 %v291
    %v325 = vunpack.c.l.b16 %v292
    %v326 = vunpack.c.l.b16 %v293
    %v327 = vpack.c.b16 %v312, %v311
    %v328 = vpack.c.b16 %v314, %v313
    %v329 = vpack.c.b16 %v316, %v315
    %v330 = vpack.c.b16 %v318, %v317
    %v331 = vpack.c.b16 %v320, %v319
    %v332 = vpack.c.b16 %v322, %v321
    %v333 = vpack.c.b16 %v324, %v323
    %v334 = vpack.c.b16 %v326, %v325
    %343 = vmatpush.bf16.msra.mxu0 %v334
    %344 = vmatpush.bf16.msra.mxu0 %v333
    %345 = vmatpush.bf16.msra.mxu0 %v332
    %346 = vmatpush.bf16.msra.mxu0 %v331
    %347 = vmatpush.bf16.msra.mxu0 %v330
    %348 = vmatpush.bf16.msra.mxu0 %v329
    %349 = vmatpush.bf16.msra.mxu0 %v328
    %350 = vmatpush.bf16.msra.mxu0 %v327
    %351 = vmatmul.bf16.gmra.mxu0 %v277
    %v352 = vpop.f32.mrf.mxu0
    %v353 = vadd.f32 %v294, %v352
    %v354 = vpop.f32.mrf.mxu0
    %v355 = vadd.f32 %v294, %v354
    %356 = vdwg.mxu0
    %v357 = vmax.f32 %v353, 0.0
    %v358 = vmax.f32 %v355, 0.0
    %v359 = vpack.c.bf16 %v358, %v357
    %v360 = vld [vmem:[%s5] sm:$0x1]
    %s361 = sld [smem:[#allocation2]]
    %v362 = vstv %s361
    %363 = vmatpush.bf16.xpose.msra.mxu0 0
    %364 = vmatpush.bf16.xpose.msra.mxu0 0
    %365 = vmatpush.bf16.xpose.msra.mxu0 0
    %366 = vmatpush.bf16.xpose.msra.mxu0 0
    %367 = vmatpush.bf16.xpose.msra.mxu0 0
    %368 = vmatpush.bf16.xpose.msra.mxu0 0
    %369 = vmatpush.bf16.xpose.msra.mxu0 0
    %370 = vmatpush.bf16.xpose.msra.mxu0 %v359
    %371 = vmatmul.bf16.gmra.mxu0 %v360
    %v372 = vpop.f32.mrf.mxu0
    %v373 = vadd.f32 %v362, %v372
    %v374 = vpop.f32.mrf.mxu0
    %375 = vdwg.mxu0
    %v376 = vtanh.pop %v373
    %vm377 = vcmask 122880
    %378 = vst.msk [vmem:[#allocation9] sm:$0x1] %vm377, %v376
    // Predicated region
    $region46: #{tpu_custom_call.1} parent=1 // pred_check
      _
    $region47: #{tpu_custom_call.1} parent=1 // pred_check_branch
      %380 = sbr.rel (0) target = $region49
    $region48: #{tpu_custom_call.1} parent=1 // pred_region
      %382 = vsyncadd [#allocation5], 0
      %s384 = sshll.u32 [#allocation9], 4
      %s385 = int_to_ptr.vmem [resolvable:$true] %s384
      %s386 = sshll.u32 %s8, 4
      %s387 = int_to_ptr.hbm [resolvable:$true] %s386
      %389 = dma.vmem_to_hbm [thread:$0]  %s385, 16, %s387, [#allocation5]
    $region49: #{tpu_custom_call.1} parent=1 // pred_fallthru
      _
    // Predicated region
    $region50: #{tpu_custom_call.1} parent=1 // pred_check
      _
    $region51: #{tpu_custom_call.1} parent=1 // pred_check_branch
      %391 = sbr.rel (0) target = $region53
    $region52: #{tpu_custom_call.1} parent=1 // pred_region
      %393 = dma.done [#allocation5], 16
    $region53: #{tpu_custom_call.1} parent=1 // pred_fallthru
      _
    %394 = vsyncpa [#allocation4], 1
    %395 = vsyncpa [#allocation7], 1
    %396 = vsyncpa [#allocation5], 1

</llo_original>
